<compile_context>
chip_gen: v5e
topology: v5e:2x2
jax: 0.10.0
libtpu: 0.0.40
codegen_flags: <defaults>
</compile_context>

<pallas_src>
import functools

import jax
import jax.numpy as jnp
from jax.experimental import pallas as pl
from jax.experimental.pallas import tpu as pltpu


# --------------------------------------------------------------------------- #
# Kernel
# --------------------------------------------------------------------------- #
def _double_critic_kernel(state_ref, action_ref,
                          w1s_ref, w1a_ref, w2_ref, w3_ref, b_ref,
                          q_ref, *, hidden, split_layer2):
    b = b_ref[...]                                     # (3, 2H) f32
    wdt = w2_ref.dtype                                 # compute (streaming) dtype

    # Layer 1:  xu @ W1  ==  state @ W1[:num_inputs] + action @ W1[num_inputs:]
    h = (jnp.dot(state_ref[...], w1s_ref[...], preferred_element_type=jnp.float32)
         + jnp.dot(action_ref[...], w1a_ref[...], preferred_element_type=jnp.float32)
         + b[0:1, :])
    h = jnp.maximum(h, 0.0)                            # ReLU, f32

    if split_layer2:
        # Two (H, H) dots on the lane-aligned hidden halves (no zero-block FLOPs).
        H = hidden
        h1 = jnp.dot(h[:, :H].astype(wdt), w2_ref[0],
                     preferred_element_type=jnp.float32) + b[1:2, :H]
        h2 = jnp.dot(h[:, H:].astype(wdt), w2_ref[1],
                     preferred_element_type=jnp.float32) + b[1:2, H:]
        h = jnp.concatenate([jnp.maximum(h1, 0.0), jnp.maximum(h2, 0.0)], axis=1)
    else:
        # Small H: fused block-diagonal (2H, 2H) matmul.
        h = jnp.dot(h.astype(wdt), w2_ref[...],
                    preferred_element_type=jnp.float32) + b[1:2, :]
        h = jnp.maximum(h, 0.0)

    # Layer 3: (2H, 2) block-diagonal head -> column 0 = q1, column 1 = q2.
    q = jnp.dot(h.astype(wdt), w3_ref[...],
                preferred_element_type=jnp.float32) + b[2:3, 0:2]
    q_ref[...] = q.astype(q_ref.dtype)


# --------------------------------------------------------------------------- #
# Parameter fusion (done once, reused every step)
# --------------------------------------------------------------------------- #
def fuse_params(params, num_inputs, *, compute_dtype=jnp.bfloat16):
    """Build the fused parameter set once. Weights stream in `compute_dtype`
    (bf16 by default -> native MXU path, half the DMA); biases stay f32."""
    w1, w2, w3 = params["w1"], params["w2"], params["w3"]
    w4, w5, w6 = params["w4"], params["w5"], params["w6"]
    H = w1.shape[1]
    split_layer2 = (H >= 128) and (H % 128 == 0)

    w1cat = jnp.concatenate([w1, w4], axis=1)          # (D, 2H)
    w1s = w1cat[:num_inputs].astype(compute_dtype)     # (num_inputs, 2H)
    w1a = w1cat[num_inputs:].astype(compute_dtype)     # (num_actions, 2H)

    if split_layer2:
        w2f = jnp.stack([w2, w5], axis=0).astype(compute_dtype)       # (2, H, H)
    else:
        w2bd = jnp.zeros((2 * H, 2 * H), jnp.float32)
        w2bd = w2bd.at[:H, :H].set(w2).at[H:, H:].set(w5)              # block_diag
        w2f = w2bd.astype(compute_dtype)

    w3bd = jnp.zeros((2 * H, 2), jnp.float32)
    w3bd = w3bd.at[:H, 0:1].set(w3).at[H:, 1:2].set(w6)                # block_diag
    w3f = w3bd.astype(compute_dtype)

    b_packed = jnp.zeros((3, 2 * H), jnp.float32)
    b_packed = b_packed.at[0, :H].set(params["b1"][0]).at[0, H:].set(params["b4"][0])
    b_packed = b_packed.at[1, :H].set(params["b2"][0]).at[1, H:].set(params["b5"][0])
    b_packed = b_packed.at[2, 0].set(params["b3"][0, 0]).at[2, 1].set(params["b6"][0, 0])

    return {"w1s": w1s, "w1a": w1a, "w2": w2f, "w3": w3f, "b": b_packed}


# --------------------------------------------------------------------------- #
# Tiling / VMEM helpers
# --------------------------------------------------------------------------- #
_VMEM_BUDGET_BYTES = 24 * 1024 * 1024   # conservative: fits v7x 32MiB scoped default


def _round_up(x, m):
    return -(-x // m) * m


def _choose_tile_b(B, max_tile_b):
    """Large tiles amortize the ~0.35us per-grid-step overhead; multiple of 8
    (sublanes) / 128, and for big batches keep the grid at >= 2 steps so the
    'parallel' batch axis can shard across both v7x TensorCores."""
    if B <= 128:
        return int(_round_up(B, 8))                    # single step, minimal padding
    half = max(128, _round_up(pl.cdiv(B, 2), 128))     # aim for >= 2 grid steps
    return int(min(_round_up(max_tile_b, 128), half))


def _vmem_estimate_bytes(tb, num_inputs, num_actions, hidden, itemsize):
    lane = lambda n: _round_up(max(n, 1), 128)
    h2 = 2 * hidden
    # double-buffered streaming inputs + (f32, lane-padded) output tile
    stream = 2 * tb * (lane(num_inputs) + lane(num_actions)) * itemsize
    stream += 2 * tb * lane(2) * 4
    # resident fused weights / packed bias (x2 for default double buffering)
    weights = 2 * ((num_inputs + num_actions) * lane(h2)
                   + h2 * lane(h2) + h2 * lane(2)) * itemsize
    weights += 2 * 8 * lane(h2) * 4
    # live f32 intermediates inside the kernel (~3 copies of (tb, 2H))
    inter = 3 * tb * lane(h2) * 4
    return stream + weights + inter


# --------------------------------------------------------------------------- #
# Plain fused-XLA path (tiny-batch fallback / cross-check)
# --------------------------------------------------------------------------- #
def fused_xla_forward(state, action, fused):
    cdt = fused["w1s"].dtype
    b = fused["b"]
    H = fused["w3"].shape[0] // 2
    h = (jnp.dot(state.astype(cdt), fused["w1s"], preferred_element_type=jnp.float32)
         + jnp.dot(action.astype(cdt), fused["w1a"], preferred_element_type=jnp.float32)
         + b[0:1, :])
    h = jnp.maximum(h, 0.0)
    if fused["w2"].ndim == 3:
        h1 = jnp.maximum(jnp.dot(h[:, :H].astype(cdt), fused["w2"][0],
                                 preferred_element_type=jnp.float32) + b[1:2, :H], 0.0)
        h2 = jnp.maximum(jnp.dot(h[:, H:].astype(cdt), fused["w2"][1],
                                 preferred_element_type=jnp.float32) + b[1:2, H:], 0.0)
        h = jnp.concatenate([h1, h2], axis=1)
    else:
        h = jnp.maximum(jnp.dot(h.astype(cdt), fused["w2"],
                                preferred_element_type=jnp.float32) + b[1:2, :], 0.0)
    q = jnp.dot(h.astype(cdt), fused["w3"], preferred_element_type=jnp.float32) + b[2:3, 0:2]
    return q[:, 0:1], q[:, 1:2]


# --------------------------------------------------------------------------- #
# Pallas forward
# --------------------------------------------------------------------------- #
def double_critic_forward(state, action, fused, *, max_tile_b=2048,
                          xla_fallback_batch=0):
    """Returns (q1, q2), each (B, 1), matching DoubleCritic.forward."""
    B, num_inputs = state.shape
    num_actions = action.shape[1]

    # Tiny-batch guard: fixed pallas_call overhead > whole-network compute.
    if B <= xla_fallback_batch:
        return fused_xla_forward(state, action, fused)

    cdt = fused["w1s"].dtype
    hidden = fused["w3"].shape[0] // 2
    split_layer2 = fused["w2"].ndim == 3

    state_c = state.astype(cdt)
    action_c = action.astype(cdt)

    # Batch tile: big, multiple of 8/128, shrunk if VMEM estimate is too large.
    itemsize = jnp.dtype(cdt).itemsize
    tb = _choose_tile_b(B, max_tile_b)
    while tb > 128 and _vmem_estimate_bytes(tb, num_inputs, num_actions,
                                            hidden, itemsize) > _VMEM_BUDGET_BYTES:
        tb = max(128, _round_up(tb // 2, 128))
    est = _vmem_estimate_bytes(tb, num_inputs, num_actions, hidden, itemsize)
    vmem_limit = int(min(32 << 20, max(2 * est, 16 << 20)))

    grid = (pl.cdiv(B, tb),)   # no wrapper padding; Pallas clips the last block

    def _resident(arr):        # weights stay VMEM-resident across all steps
        nd = arr.ndim
        return pl.BlockSpec(arr.shape, lambda i, _nd=nd: (0,) * _nd)

    kernel = functools.partial(_double_critic_kernel,
                               hidden=hidden, split_layer2=split_layer2)

    q = pl.pallas_call(
        kernel,
        out_shape=jax.ShapeDtypeStruct((B, 2), jnp.float32),
        grid=grid,
        in_specs=[
            pl.BlockSpec((tb, num_inputs), lambda i: (i, 0)),    # state tile
            pl.BlockSpec((tb, num_actions), lambda i: (i, 0)),   # action tile
            _resident(fused["w1s"]),
            _resident(fused["w1a"]),
            _resident(fused["w2"]),
            _resident(fused["w3"]),
            _resident(fused["b"]),
        ],
        out_specs=pl.BlockSpec((tb, 2), lambda i: (i, 0)),
        compiler_params=pltpu.CompilerParams(
            dimension_semantics=("parallel",),
            vmem_limit_bytes=vmem_limit),
    )(state_c, action_c, fused["w1s"], fused["w1a"],
      fused["w2"], fused["w3"], fused["b"])

    return q[:, 0:1], q[:, 1:2]


# --------------------------------------------------------------------------- #
# Reference (un-fused, f32) and init
# --------------------------------------------------------------------------- #
def init_params(key, num_inputs, num_actions, hidden_dim):
    """Xavier-uniform weights (gain=1), zero biases — matches weights_init_.
    Weights stored as (in, out) == transpose of torch's (out, in)."""
    d_in = num_inputs + num_actions

    def xavier(k, fan_in, fan_out):
        bound = jnp.sqrt(6.0 / (fan_in + fan_out))
        return jax.random.uniform(k, (fan_in, fan_out), jnp.float32,
                                  minval=-bound, maxval=bound)

    ks = jax.random.split(key, 6)
    return {
        "w1": xavier(ks[0], d_in, hidden_dim), "b1": jnp.zeros((1, hidden_dim), jnp.float32),
        "w2": xavier(ks[1], hidden_dim, hidden_dim), "b2": jnp.zeros((1, hidden_dim), jnp.float32),
        "w3": xavier(ks[2], hidden_dim, 1), "b3": jnp.zeros((1, 1), jnp.float32),
        "w4": xavier(ks[3], d_in, hidden_dim), "b4": jnp.zeros((1, hidden_dim), jnp.float32),
        "w5": xavier(ks[4], hidden_dim, hidden_dim), "b5": jnp.zeros((1, hidden_dim), jnp.float32),
        "w6": xavier(ks[5], hidden_dim, 1), "b6": jnp.zeros((1, 1), jnp.float32),
    }


def reference_forward(state, action, p):
    xu = jnp.concatenate([state, action], axis=1)
    x1 = jnp.maximum(xu @ p["w1"] + p["b1"], 0.0)
    x1 = jnp.maximum(x1 @ p["w2"] + p["b2"], 0.0)
    x1 = x1 @ p["w3"] + p["b3"]
    x2 = jnp.maximum(xu @ p["w4"] + p["b4"], 0.0)
    x2 = jnp.maximum(x2 @ p["w5"] + p["b5"], 0.0)
    x2 = x2 @ p["w6"] + p["b6"]
    return x1, x2


if __name__ == "__main__":
    key = jax.random.PRNGKey(0)
    ks = jax.random.split(key, 6)

    # --- Case 1: spec-sized demo, f32 streaming -> tight check vs reference. ---
    B1, n_in1, n_act1, H1 = 8, 24, 8, 32
    s1 = jax.random.normal(ks[0], (B1, n_in1), jnp.float32)
    a1 = jax.random.normal(ks[1], (B1, n_act1), jnp.float32)
    p1 = init_params(ks[2], n_in1, n_act1, H1)
    f1 = fuse_params(p1, n_in1, compute_dtype=jnp.float32)
    q1, q2 = double_critic_forward(s1, a1, f1)
    jax.block_until_ready((q1, q2))
    r1, r2 = reference_forward(s1, a1, p1)
    assert q1.shape == (B1, 1) and q2.shape == (B1, 1)
    assert jnp.allclose(q1, r1, atol=1e-4, rtol=1e-4)
    assert jnp.allclose(q2, r2, atol=1e-4, rtol=1e-4)

    # --- Case 2: bf16 streaming, 2 grid steps with a partial last block,
    #             H=128 exercises the split layer-2 path. -----------------------
    B2, n_in2, n_act2, H2 = 300, 24, 8, 128
    s2 = jax.random.normal(ks[3], (B2, n_in2), jnp.float32)
    a2 = jax.random.normal(ks[4], (B2, n_act2), jnp.float32)
    p2 = init_params(ks[5], n_in2, n_act2, H2)
    f2 = fuse_params(p2, n_in2)                        # bf16 by default
    q1b, q2b = double_critic_forward(s2, a2, f2)
    jax.block_until_ready((q1b, q2b))
    assert q1b.shape == (B2, 1) and q2b.shape == (B2, 1)
    # exact-path check against the same bf16 fused math run through plain XLA
    x1, x2 = fused_xla_forward(s2, a2, f2)
    assert jnp.allclose(q1b, x1, atol=5e-3, rtol=5e-3)
    assert jnp.allclose(q2b, x2, atol=5e-3, rtol=5e-3)
    # loose sanity check against the f32 un-fused reference (bf16 quantization)
    r1b, r2b = reference_forward(s2, a2, p2)
    assert jnp.allclose(q1b, r1b, atol=0.3, rtol=0.1)
    assert jnp.allclose(q2b, r2b, atol=0.3, rtol=0.1)

    print("KERNEL_OK")
</pallas_src>

<mosaic_0001>
module attributes {stable_mosaic.version = 11 : i64} {
  func.func @_double_critic_kernel(%arg0: i32, %arg1: memref<8x24xf32, #tpu.memory_space<vmem>>, %arg2: memref<8x8xf32, #tpu.memory_space<vmem>>, %arg3: memref<24x64xf32, #tpu.memory_space<vmem>>, %arg4: memref<8x64xf32, #tpu.memory_space<vmem>>, %arg5: memref<64x64xf32, #tpu.memory_space<vmem>>, %arg6: memref<64x2xf32, #tpu.memory_space<vmem>>, %arg7: memref<3x64xf32, #tpu.memory_space<vmem>>, %arg8: memref<8x2xf32, #tpu.memory_space<vmem>>) attributes {dimension_semantics = [#tpu.dimension_semantics<parallel>], iteration_bounds = array<i64: 1>, scalar_prefetch = 0 : i64, scratch_operands = 0 : i64, tpu.core_type = #tpu.core_type<tc>, window_params = [{transform_indices = @transform_0, window_bounds = array<i64: 8, 24>}, {transform_indices = @transform_1, window_bounds = array<i64: 8, 8>}, {pipeline_mode = #tpu.pipeline_mode<synchronous>, transform_indices = @transform_2, window_bounds = array<i64: 24, 64>}, {pipeline_mode = #tpu.pipeline_mode<synchronous>, transform_indices = @transform_3, window_bounds = array<i64: 8, 64>}, {pipeline_mode = #tpu.pipeline_mode<synchronous>, transform_indices = @transform_4, window_bounds = array<i64: 64, 64>}, {pipeline_mode = #tpu.pipeline_mode<synchronous>, transform_indices = @transform_5, window_bounds = array<i64: 64, 2>}, {pipeline_mode = #tpu.pipeline_mode<synchronous>, transform_indices = @transform_6, window_bounds = array<i64: 3, 64>}, {transform_indices = @transform_7, window_bounds = array<i64: 8, 2>}]} {
    %c0 = arith.constant 0 : index
    %c0_0 = arith.constant 0 : index
    %0 = vector.load %arg7[%c0, %c0_0] : memref<3x64xf32, #tpu.memory_space<vmem>>, vector<3x64xf32>
    %c0_1 = arith.constant 0 : index
    %c0_2 = arith.constant 0 : index
    %1 = vector.load %arg1[%c0_1, %c0_2] : memref<8x24xf32, #tpu.memory_space<vmem>>, vector<8x24xf32>
    %c0_3 = arith.constant 0 : index
    %c0_4 = arith.constant 0 : index
    %2 = vector.load %arg3[%c0_3, %c0_4] : memref<24x64xf32, #tpu.memory_space<vmem>>, vector<24x64xf32>
    %cst = arith.constant dense<0.000000e+00> : vector<8x64xf32>
    %3 = tpu.matmul %1, %2, %cst {dimension_numbers = #tpu.dot_dimension_numbers<[1], [0], [0], [1], [0, 0, 1, 1], [], []>} : vector<8x24xf32>, vector<24x64xf32>, vector<8x64xf32> -> vector<8x64xf32>
    %c0_5 = arith.constant 0 : index
    %c0_6 = arith.constant 0 : index
    %4 = vector.load %arg2[%c0_5, %c0_6] : memref<8x8xf32, #tpu.memory_space<vmem>>, vector<8x8xf32>
    %c0_7 = arith.constant 0 : index
    %c0_8 = arith.constant 0 : index
    %5 = vector.load %arg4[%c0_7, %c0_8] : memref<8x64xf32, #tpu.memory_space<vmem>>, vector<8x64xf32>
    %cst_9 = arith.constant dense<0.000000e+00> : vector<8x64xf32>
    %6 = tpu.matmul %4, %5, %cst_9 {dimension_numbers = #tpu.dot_dimension_numbers<[1], [0], [0], [1], [0, 0, 1, 1], [], []>} : vector<8x8xf32>, vector<8x64xf32>, vector<8x64xf32> -> vector<8x64xf32>
    %7 = arith.addf %3, %6 : vector<8x64xf32>
    %8 = vector.extract_strided_slice %0 {offsets = [0, 0], sizes = [1, 64], strides = [1, 1]} : vector<3x64xf32> to vector<1x64xf32>
    %9 = vector.broadcast %8 : vector<1x64xf32> to vector<8x64xf32>
    %10 = arith.addf %7, %9 : vector<8x64xf32>
    %cst_10 = arith.constant 0.000000e+00 : f32
    %11 = vector.broadcast %cst_10 : f32 to vector<8x64xf32>
    %12 = arith.maximumf %10, %11 : vector<8x64xf32>
    %c0_11 = arith.constant 0 : index
    %c0_12 = arith.constant 0 : index
    %13 = vector.load %arg5[%c0_11, %c0_12] : memref<64x64xf32, #tpu.memory_space<vmem>>, vector<64x64xf32>
    %cst_13 = arith.constant dense<0.000000e+00> : vector<8x64xf32>
    %14 = tpu.matmul %12, %13, %cst_13 {dimension_numbers = #tpu.dot_dimension_numbers<[1], [0], [0], [1], [0, 0, 1, 1], [], []>} : vector<8x64xf32>, vector<64x64xf32>, vector<8x64xf32> -> vector<8x64xf32>
    %15 = vector.extract_strided_slice %0 {offsets = [1, 0], sizes = [1, 64], strides = [1, 1]} : vector<3x64xf32> to vector<1x64xf32>
    %16 = vector.broadcast %15 : vector<1x64xf32> to vector<8x64xf32>
    %17 = arith.addf %14, %16 : vector<8x64xf32>
    %cst_14 = arith.constant 0.000000e+00 : f32
    %18 = vector.broadcast %cst_14 : f32 to vector<8x64xf32>
    %19 = arith.maximumf %17, %18 : vector<8x64xf32>
    %c0_15 = arith.constant 0 : index
    %c0_16 = arith.constant 0 : index
    %20 = vector.load %arg6[%c0_15, %c0_16] : memref<64x2xf32, #tpu.memory_space<vmem>>, vector<64x2xf32>
    %cst_17 = arith.constant dense<0.000000e+00> : vector<8x2xf32>
    %21 = tpu.matmul %19, %20, %cst_17 {dimension_numbers = #tpu.dot_dimension_numbers<[1], [0], [0], [1], [0, 0, 1, 1], [], []>} : vector<8x64xf32>, vector<64x2xf32>, vector<8x2xf32> -> vector<8x2xf32>
    %22 = vector.extract_strided_slice %0 {offsets = [2, 0], sizes = [1, 2], strides = [1, 1]} : vector<3x64xf32> to vector<1x2xf32>
    %23 = vector.broadcast %22 : vector<1x2xf32> to vector<8x2xf32>
    %24 = arith.addf %21, %23 : vector<8x2xf32>
    %c0_18 = arith.constant 0 : index
    %c0_19 = arith.constant 0 : index
    %25 = vector.load %arg8[%c0_18, %c0_19] : memref<8x2xf32, #tpu.memory_space<vmem>>, vector<8x2xf32>
    tpu.vector_store %arg8[%c0_18, %c0_19], %24 {strides = array<i32>} : memref<8x2xf32, #tpu.memory_space<vmem>>, vector<8x2xf32>,
    return
  }
  func.func @transform_0(%arg0: i32) -> (i32, i32) {
    %c0_i32 = arith.constant 0 : i32
    %c0_i32_0 = arith.constant 0 : i32
    return %arg0, %c0_i32 : i32, i32
  }
  func.func @transform_1(%arg0: i32) -> (i32, i32) {
    %c0_i32 = arith.constant 0 : i32
    %c0_i32_0 = arith.constant 0 : i32
    return %arg0, %c0_i32 : i32, i32
  }
  func.func @transform_2(%arg0: i32) -> (i32, i32) {
    %c0_i32 = arith.constant 0 : i32
    %c0_i32_0 = arith.constant 0 : i32
    %c0_i32_1 = arith.constant 0 : i32
    return %c0_i32, %c0_i32_0 : i32, i32
  }
  func.func @transform_3(%arg0: i32) -> (i32, i32) {
    %c0_i32 = arith.constant 0 : i32
    %c0_i32_0 = arith.constant 0 : i32
    %c0_i32_1 = arith.constant 0 : i32
    return %c0_i32, %c0_i32_0 : i32, i32
  }
  func.func @transform_4(%arg0: i32) -> (i32, i32) {
    %c0_i32 = arith.constant 0 : i32
    %c0_i32_0 = arith.constant 0 : i32
    %c0_i32_1 = arith.constant 0 : i32
    return %c0_i32, %c0_i32_0 : i32, i32
  }
  func.func @transform_5(%arg0: i32) -> (i32, i32) {
    %c0_i32 = arith.constant 0 : i32
    %c0_i32_0 = arith.constant 0 : i32
    %c0_i32_1 = arith.constant 0 : i32
    return %c0_i32, %c0_i32_0 : i32, i32
  }
  func.func @transform_6(%arg0: i32) -> (i32, i32) {
    %c0_i32 = arith.constant 0 : i32
    %c0_i32_0 = arith.constant 0 : i32
    %c0_i32_1 = arith.constant 0 : i32
    return %c0_i32, %c0_i32_0 : i32, i32
  }
  func.func @transform_7(%arg0: i32) -> (i32, i32) {
    %c0_i32 = arith.constant 0 : i32
    %c0_i32_0 = arith.constant 0 : i32
    return %arg0, %c0_i32 : i32, i32
  }
}

</mosaic_0001>

<llo_original>
// kernel: tpu_custom_call.1
$region0: #{tpu_custom_call.1}
  #allocation0 [shape = 'u32[]', space=smem, size = 0x4, offset = 0x4, fixed_abs, tag = 'smem constant byte address 0x4 - core index']
  #allocation1 [shape = 'u32[72,128]{1,0:T(1,128)}', space=vmem, size = 0x9000, scoped, tag = 'internal scratch']
  %s0 = inlined_call_operand.hbm [shape: f32[8,24], index: 0, kind: input, shape index: {}]
  %s1 = inlined_call_operand.hbm [shape: f32[8,8], index: 1, kind: input, shape index: {}]
  %s2 = inlined_call_operand.hbm [shape: f32[24,64], index: 2, kind: input, shape index: {}]
  %s3 = inlined_call_operand.hbm [shape: f32[8,64], index: 3, kind: input, shape index: {}]
  %s4 = inlined_call_operand.vmem [shape: f32[64,64], index: 4, kind: input, shape index: {}]
  %s5 = inlined_call_operand.vmem [shape: f32[64,2], index: 5, kind: input, shape index: {}]
  %s6 = inlined_call_operand.hbm [shape: f32[3,64], index: 6, kind: input, shape index: {}]
  %s7 = inlined_call_operand.vmem [shape: f32[8,2], index: 7, kind: output, shape index: {}]
  %s8 = sld [smem:[#allocation0]]
  $region58: #{tpu_custom_call.1} parent=0
    _
  %s10 = ssub.s32 1, %s8
  %s11 = scalar_select 0, %s10, %s8
  $region1: #{tpu_custom_call.1} parent=0
    #allocation2 [shape = 'u8[4096]{0}', space=vmem, size = 0x1000, scoped, tag = 'input window, operand 0, single buffered']
    #allocation3 [shape = 's32[1]{0}', space=sflag, size = 0x4, scoped, tag = 'scoped memory for tpu_custom_call.1']
    #allocation4 [shape = 'u8[4096]{0}', space=vmem, size = 0x1000, scoped, tag = 'input window, operand 1, single buffered']
    #allocation5 [shape = 's32[1]{0}', space=sflag, size = 0x4, scoped, tag = 'scoped memory for tpu_custom_call.1']
    #allocation6 [shape = 'u8[12288]{0}', space=vmem, size = 0x3000, scoped, tag = 'input window, operand 2, single buffered']
    #allocation7 [shape = 'u8[4096]{0}', space=vmem, size = 0x1000, scoped, tag = 'input window, operand 3, single buffered']
    #allocation8 [shape = 's32[1]{0}', space=sflag, size = 0x4, scoped, tag = 'scoped memory for tpu_custom_call.1']
    #allocation9 [shape = 'u8[2048]{0}', space=vmem, size = 0x800, scoped, tag = 'input window, operand 6, single buffered']
    %12 = vsyncpa [#allocation3], 0
    %13 = vsyncpa [#allocation5], 0
    %14 = vsyncpa [#allocation8], 0
    // Predicated region
    $region2: #{tpu_custom_call.1} parent=1 // pred_check
      _
    $region3: #{tpu_custom_call.1} parent=1 // pred_check_branch
      %16 = sbr.rel (0) target = $region5
    $region4: #{tpu_custom_call.1} parent=1 // pred_region
      %18 = vsyncadd [#allocation3], 0
      %s20 = sshll.u32 %s0, 4
      %s21 = int_to_ptr.hbm [resolvable:$true] %s20
      %s22 = sshll.u32 [#allocation2], 4
      %s23 = int_to_ptr.vmem [resolvable:$true] %s22
      %25 = dma.hbm_to_vmem [thread:$0]  %s21, 128, %s23, [#allocation3]
    $region5: #{tpu_custom_call.1} parent=1 // pred_fallthru
      _
    // Predicated region
    $region6: #{tpu_custom_call.1} parent=1 // pred_check
      _
    $region7: #{tpu_custom_call.1} parent=1 // pred_check_branch
      %27 = sbr.rel (0) target = $region9
    $region8: #{tpu_custom_call.1} parent=1 // pred_region
      %29 = vsyncadd [#allocation5], 0
      %s31 = sshll.u32 %s1, 4
      %s32 = int_to_ptr.hbm [resolvable:$true] %s31
      %s33 = sshll.u32 [#allocation4], 4
      %s34 = int_to_ptr.vmem [resolvable:$true] %s33
      %36 = dma.hbm_to_vmem [thread:$0]  %s32, 128, %s34, [#allocation5]
    $region9: #{tpu_custom_call.1} parent=1 // pred_fallthru
      _
    // Predicated region
    $region10: #{tpu_custom_call.1} parent=1 // pred_check
      _
    $region11: #{tpu_custom_call.1} parent=1 // pred_check_branch
      %38 = sbr.rel (0) target = $region13
    $region12: #{tpu_custom_call.1} parent=1 // pred_region
      %40 = vsyncadd [#allocation5], 0
      %s41 = sshll.u32 %s2, 4
      %s42 = int_to_ptr.hbm [resolvable:$true] %s41
      %s43 = sshll.u32 [#allocation6], 4
      %s44 = int_to_ptr.vmem [resolvable:$true] %s43
      %49 = dma.hbm_to_vmem [thread:$0]  %s42, 384, %s44, [#allocation5], 128, 128, 8
    $region13: #{tpu_custom_call.1} parent=1 // pred_fallthru
      _
    // Predicated region
    $region14: #{tpu_custom_call.1} parent=1 // pred_check
      _
    $region15: #{tpu_custom_call.1} parent=1 // pred_check_branch
      %51 = sbr.rel (0) target = $region17
    $region16: #{tpu_custom_call.1} parent=1 // pred_region
      %53 = vsyncadd [#allocation8], 0
      %s55 = sshll.u32 %s3, 4
      %s56 = int_to_ptr.hbm [resolvable:$true] %s55
      %s57 = sshll.u32 [#allocation7], 4
      %s58 = int_to_ptr.vmem [resolvable:$true] %s57
      %60 = dma.hbm_to_vmem [thread:$0]  %s56, 128, %s58, [#allocation8]
    $region17: #{tpu_custom_call.1} parent=1 // pred_fallthru
      _
    // Predicated region
    $region18: #{tpu_custom_call.1} parent=1 // pred_check
      _
    $region19: #{tpu_custom_call.1} parent=1 // pred_check_branch
      %62 = sbr.rel (0) target = $region21
    $region20: #{tpu_custom_call.1} parent=1 // pred_region
      _
    $region21: #{tpu_custom_call.1} parent=1 // pred_fallthru
      _
    // Predicated region
    $region22: #{tpu_custom_call.1} parent=1 // pred_check
      _
    $region23: #{tpu_custom_call.1} parent=1 // pred_check_branch
      %64 = sbr.rel (0) target = $region25
    $region24: #{tpu_custom_call.1} parent=1 // pred_region
      _
    $region25: #{tpu_custom_call.1} parent=1 // pred_fallthru
      _
    // Predicated region
    $region26: #{tpu_custom_call.1} parent=1 // pred_check
      _
    $region27: #{tpu_custom_call.1} parent=1 // pred_check_branch
      %66 = sbr.rel (0) target = $region29
    $region28: #{tpu_custom_call.1} parent=1 // pred_region
      %68 = vsyncadd [#allocation8], 0
      %s70 = sshll.u32 %s6, 4
      %s71 = int_to_ptr.hbm [resolvable:$true] %s70
      %s72 = sshll.u32 [#allocation9], 4
      %s73 = int_to_ptr.vmem [resolvable:$true] %s72
      %75 = dma.hbm_to_vmem [thread:$0]  %s71, 64, %s73, [#allocation8]
    $region29: #{tpu_custom_call.1} parent=1 // pred_fallthru
      _
    // Predicated region
    $region30: #{tpu_custom_call.1} parent=1 // pred_check
      _
    $region31: #{tpu_custom_call.1} parent=1 // pred_check_branch
      %77 = sbr.rel (0) target = $region33
    $region32: #{tpu_custom_call.1} parent=1 // pred_region
      %79 = dma.done [#allocation3], 128
    $region33: #{tpu_custom_call.1} parent=1 // pred_fallthru
      _
    // Predicated region
    $region34: #{tpu_custom_call.1} parent=1 // pred_check
      _
    $region35: #{tpu_custom_call.1} parent=1 // pred_check_branch
      %81 = sbr.rel (0) target = $region37
    $region36: #{tpu_custom_call.1} parent=1 // pred_region
      %83 = dma.done [#allocation5], 128
    $region37: #{tpu_custom_call.1} parent=1 // pred_fallthru
      _
    // Predicated region
    $region38: #{tpu_custom_call.1} parent=1 // pred_check
      _
    $region39: #{tpu_custom_call.1} parent=1 // pred_check_branch
      %85 = sbr.rel (0) target = $region41
    $region40: #{tpu_custom_call.1} parent=1 // pred_region
      %87 = dma.done [#allocation5], 384
    $region41: #{tpu_custom_call.1} parent=1 // pred_fallthru
      _
    // Predicated region
    $region42: #{tpu_custom_call.1} parent=1 // pred_check
      _
    $region43: #{tpu_custom_call.1} parent=1 // pred_check_branch
      %89 = sbr.rel (0) target = $region45
    $region44: #{tpu_custom_call.1} parent=1 // pred_region
      %91 = dma.done [#allocation8], 128
    $region45: #{tpu_custom_call.1} parent=1 // pred_fallthru
      _
    // Predicated region
    $region46: #{tpu_custom_call.1} parent=1 // pred_check
      _
    $region47: #{tpu_custom_call.1} parent=1 // pred_check_branch
      %93 = sbr.rel (0) target = $region49
    $region48: #{tpu_custom_call.1} parent=1 // pred_region
      %95 = dma.done [#allocation8], 64
    $region49: #{tpu_custom_call.1} parent=1 // pred_fallthru
      _
    %v96 = vld [vmem:[#allocation9] sm:$0x7]
    %v97 = vld [vmem:[#allocation2] sm:$0xff]
    %v98 = vld [vmem:[#allocation6] sm:$0xff]
    %v99 = vld [vmem:[#allocation6 + $0x8] sm:$0xff]
    %v100 = vld [vmem:[#allocation6 + $0x10] sm:$0xff]
    %v101 = vld [vmem:[#allocation4] sm:$0xff]
    %v102 = vld [vmem:[#allocation7] sm:$0xff]
    %vm103 = vcmask 64512
    %v105 = vsel %vm103, %v101, 0
    %107 = vmatpush.msra.mxu0 0.0
    %108 = vmatpush.msra.mxu0 0.0
    %109 = vmatpush.msra.mxu0 0.0
    %110 = vmatpush.msra.mxu0 0.0
    %111 = vmatpush.msra.mxu0 0.0
    %112 = vmatpush.msra.mxu0 0.0
    %113 = vmatpush.msra.mxu0 0.0
    %114 = vmatpush.msra.mxu0 0.0
    %115 = vmatpush.msra.mxu0 0.0
    %116 = vmatpush.msra.mxu0 0.0
    %117 = vmatpush.msra.mxu0 0.0
    %118 = vmatpush.msra.mxu0 0.0
    %119 = vmatpush.msra.mxu0 0.0
    %120 = vmatpush.msra.mxu0 0.0
    %121 = vmatpush.msra.mxu0 0.0
    %122 = vmatpush.msra.mxu0 %v102
    %123 = vmatmul.f32.gmra.mxu0 %v105
    %v124 = vpop.f32.mrf.mxu0
    %v125 = vadd.f32 0.0, %v124
    %126 = vdwg.mxu0
    %vm127 = vcmask 195584
    %v129 = vsel %vm127, %v97, 0
    %131 = vmatpush.msra.mxu0 0.0
    %132 = vmatpush.msra.mxu0 0.0
    %133 = vmatpush.msra.mxu0 0.0
    %134 = vmatpush.msra.mxu0 0.0
    %135 = vmatpush.msra.mxu0 0.0
    %136 = vmatpush.msra.mxu0 0.0
    %137 = vmatpush.msra.mxu0 0.0
    %138 = vmatpush.msra.mxu0 0.0
    %139 = vmatpush.msra.mxu0 0.0
    %140 = vmatpush.msra.mxu0 0.0
    %141 = vmatpush.msra.mxu0 0.0
    %142 = vmatpush.msra.mxu0 0.0
    %143 = vmatpush.msra.mxu0 0.0
    %144 = vmatpush.msra.mxu0 %v100
    %145 = vmatpush.msra.mxu0 %v99
    %146 = vmatpush.msra.mxu0 %v98
    %147 = vmatmul.f32.gmra.mxu0 %v129
    %v148 = vpop.f32.mrf.mxu0
    %v149 = vadd.f32 %v125, %v148
    %150 = vdwg.mxu0
    %v151 = vperm.slane %v96, 0
    %v152 = vadd.f32 %v149, %v151
    %v153 = vmax.f32 %v152, 0.0
    %v154 = vld [vmem:[%s4] sm:$0xff]
    %v155 = vld [vmem:[%s4 + $0x8] sm:$0xff]
    %v156 = vld [vmem:[%s4 + $0x10] sm:$0xff]
    %v157 = vld [vmem:[%s4 + $0x18] sm:$0xff]
    %v158 = vld [vmem:[%s4 + $0x20] sm:$0xff]
    %v159 = vld [vmem:[%s4 + $0x28] sm:$0xff]
    %v160 = vld [vmem:[%s4 + $0x30] sm:$0xff]
    %v161 = vld [vmem:[%s4 + $0x38] sm:$0xff]
    %v162 = vperm.slane %v96, 1
    %vm163 = vcmask 523264
    %v165 = vsel %vm163, %v153, 0
    %167 = vmatpush.msra.mxu0 0.0
    %168 = vmatpush.msra.mxu0 0.0
    %169 = vmatpush.msra.mxu0 0.0
    %170 = vmatpush.msra.mxu0 0.0
    %171 = vmatpush.msra.mxu0 0.0
    %172 = vmatpush.msra.mxu0 0.0
    %173 = vmatpush.msra.mxu0 0.0
    %174 = vmatpush.msra.mxu0 0.0
    %175 = vmatpush.msra.mxu0 %v161
    %176 = vmatpush.msra.mxu0 %v160
    %177 = vmatpush.msra.mxu0 %v159
    %178 = vmatpush.msra.mxu0 %v158
    %179 = vmatpush.msra.mxu0 %v157
    %180 = vmatpush.msra.mxu0 %v156
    %181 = vmatpush.msra.mxu0 %v155
    %182 = vmatpush.msra.mxu0 %v154
    %183 = vmatmul.f32.gmra.mxu0 %v165
    %v184 = vpop.f32.mrf.mxu0
    %v185 = vadd.f32 %v162, %v184
    %186 = vdwg.mxu0
    %v187 = vmax.f32 %v185, 0.0
    %v188 = vld [vmem:[%s5] sm:$0xff]
    %v189 = vld [vmem:[%s5 + $0x8] sm:$0xff]
    %v190 = vld [vmem:[%s5 + $0x10] sm:$0xff]
    %v191 = vld [vmem:[%s5 + $0x18] sm:$0xff]
    %v192 = vld [vmem:[%s5 + $0x20] sm:$0xff]
    %v193 = vld [vmem:[%s5 + $0x28] sm:$0xff]
    %v194 = vld [vmem:[%s5 + $0x30] sm:$0xff]
    %v195 = vld [vmem:[%s5 + $0x38] sm:$0xff]
    %v196 = vperm.slane %v96, 2
    %v198 = vsel %vm163, %v187, 0
    %200 = vmatpush.msra.mxu0 0.0
    %201 = vmatpush.msra.mxu0 0.0
    %202 = vmatpush.msra.mxu0 0.0
    %203 = vmatpush.msra.mxu0 0.0
    %204 = vmatpush.msra.mxu0 0.0
    %205 = vmatpush.msra.mxu0 0.0
    %206 = vmatpush.msra.mxu0 0.0
    %207 = vmatpush.msra.mxu0 0.0
    %208 = vmatpush.msra.mxu0 %v195
    %209 = vmatpush.msra.mxu0 %v194
    %210 = vmatpush.msra.mxu0 %v193
    %211 = vmatpush.msra.mxu0 %v192
    %212 = vmatpush.msra.mxu0 %v191
    %213 = vmatpush.msra.mxu0 %v190
    %214 = vmatpush.msra.mxu0 %v189
    %215 = vmatpush.msra.mxu0 %v188
    %216 = vmatmul.f32.gmra.mxu0 %v198
    %v217 = vpop.f32.mrf.mxu0
    %v218 = vadd.f32 %v196, %v217
    %219 = vdwg.mxu0
    %vm220 = vcmask 15360
    %221 = vst.msk [vmem:[%s7] sm:$0xff] %vm220, %v218
    // Predicated region
    $region50: #{tpu_custom_call.1} parent=1 // pred_check
      _
    $region51: #{tpu_custom_call.1} parent=1 // pred_check_branch
      %223 = sbr.rel (0) target = $region53
    $region52: #{tpu_custom_call.1} parent=1 // pred_region
      _
    $region53: #{tpu_custom_call.1} parent=1 // pred_fallthru
      _
    // Predicated region
    $region54: #{tpu_custom_call.1} parent=1 // pred_check
      _
    $region55: #{tpu_custom_call.1} parent=1 // pred_check_branch
      %225 = sbr.rel (0) target = $region57
    $region56: #{tpu_custom_call.1} parent=1 // pred_region
      _
    $region57: #{tpu_custom_call.1} parent=1 // pred_fallthru
      _
    %226 = vsyncpa [#allocation3], 1
    %227 = vsyncpa [#allocation5], 1
    %228 = vsyncpa [#allocation8], 1

</llo_original>
